<compile_context>
chip_gen: v5e
topology: v5e:2x2
jax: 0.10.0
libtpu: 0.0.40
codegen_flags: <defaults>
</compile_context>

<pallas_src>
import functools

import jax
import jax.numpy as jnp
from jax.experimental import pallas as pl
from jax.experimental.pallas import tpu as pltpu


def _round_up(x, m):
    return (x + m - 1) // m * m


def _make_kernel(n_hidden, n_pads, mx_dtype):
    """Build the fused-MLP kernel for a fixed layer count / per-layer widths.

    Ref layout (in order):
      x_ref            : (block_b, d_in_pad)   activations, mx_dtype (bf16/f32)
      w_refs[l]        : (k_pad_l, n_pad_l)    BN-folded weights, mx_dtype
      vec_ref          : (n_hidden + 1, n_max_pad) f32
                         rows [0, n_hidden)  : folded biases per hidden layer
                         row  n_hidden       : output projection row (BN-folded)
      out_ref          : (1, block_b)          lane-dense output slab block
    """
    def kernel(*refs):
        x_ref = refs[0]
        w_refs = refs[1:1 + n_hidden]
        vec_ref = refs[1 + n_hidden]
        out_ref = refs[2 + n_hidden]

        h_mx = x_ref[...]                                  # mx_dtype
        h_f32 = None
        for l in range(n_hidden):
            z = jnp.dot(h_mx, w_refs[l][...],
                        preferred_element_type=jnp.float32)
            bias = vec_ref[l:l + 1, :n_pads[l]]            # (1, n_pad_l) f32
            h_f32 = jnp.maximum(z + bias, 0.0)             # bias + ReLU in f32
            h_mx = h_f32.astype(mx_dtype)                  # feed next MXU in bf16

        w_row = vec_ref[n_hidden:n_hidden + 1, :n_pads[-1]]   # (1, n_pad_last)
        # N=1 output matmul -> VPU multiply + XLU lane reduction.
        r = jnp.sum(h_f32 * w_row, axis=-1)                # (block_b,)
        out_ref[...] = r[None, :]                          # lane-dense store
    return kernel


def fold_params(params, eps=1e-5, matmul_dtype=jnp.bfloat16):
    """Fold eval-mode BatchNorm into the following layer and pad per-layer.

    Do this ONCE per parameter set (not per forward call).
    """
    hidden = params["hidden"]
    n_hidden = len(hidden)
    d_in = hidden[0][0].shape[0]
    d_in_pad = _round_up(d_in, 128)

    ws_f, bs_f = [], []
    scale_prev = shift_prev = None
    for (w, b, g, be, mu, var) in hidden:
        if scale_prev is not None:
            # Fold previous layer's BN affine (scale*r + shift) into this Linear.
            b = b + shift_prev @ w                 # uses the ORIGINAL w
            w = scale_prev.reshape(-1, 1) * w
        ws_f.append(w)
        bs_f.append(b)
        # This layer's BN (applied after ReLU): y = scale*r + shift.
        scale = g * jax.lax.rsqrt(var + eps)
        shift = be - mu * scale
        scale_prev, shift_prev = scale, shift

    # Fold last hidden layer's BN into the (bias-free) output projection.
    w_out = params["w_out"]                                  # (H_last, 1)
    c_out = (shift_prev @ w_out)[0, 0]                       # scalar constant
    w_out_row = (scale_prev.reshape(-1, 1) * w_out)[:, 0]    # (H_last,)

    # Per-layer padding to (round_up(K,128), round_up(N,128)); weights in bf16.
    n_pads = [_round_up(w.shape[1], 128) for w in ws_f]
    k_pads = [d_in_pad] + n_pads[:-1]
    n_max = max(n_pads)

    ws_pad = []
    for w, kp, np_ in zip(ws_f, k_pads, n_pads):
        wp = jnp.zeros((kp, np_), jnp.float32).at[:w.shape[0], :w.shape[1]].set(w)
        ws_pad.append(wp.astype(matmul_dtype))

    vecs = jnp.zeros((n_hidden + 1, n_max), jnp.float32)
    for l, b in enumerate(bs_f):
        vecs = vecs.at[l, :b.shape[1]].set(b[0])
    vecs = vecs.at[n_hidden, :w_out_row.shape[0]].set(w_out_row)

    return {
        "embeddings": tuple(params["embeddings"]),
        "ws": tuple(ws_pad),
        "vecs": vecs,
        "c_out": c_out,
    }


def _pick_block_b(B):
    """Batch tile: big tiles to amortize per-step overhead, >=2 steps when large
    (v7x megacore), multiples of 128 whenever the grid has more than one step
    (keeps the lane-dense output blocks aligned)."""
    if B <= 256:
        return _round_up(B, 8)                    # single full-batch tile
    if B <= 2048:
        return _round_up((B + 1) // 2, 128)       # 2 steps
    return 1024                                   # >=3 steps, 1024-row tiles


@jax.jit
def mixed_input_mlp_cox_time(folded, input_numeric, input_categoric, time):
    """Forward pass. Embedding lookup / concat in JAX, fused MLP in Pallas.

    `folded` must come from fold_params(params) (cache it across calls)."""
    # --- glue: CoxTime concatenates time onto the numeric input, then the
    #     entity embeddings of each categorical column.
    embs = [tbl[input_categoric[:, i]] for i, tbl in enumerate(folded["embeddings"])]
    x = jnp.concatenate([input_numeric.astype(jnp.float32),
                         time.astype(jnp.float32)] + embs, axis=1)
    B, d_in = x.shape

    ws = folded["ws"]
    vecs = folded["vecs"]
    n_hidden = len(ws)
    d_in_pad = ws[0].shape[0]
    n_pads = tuple(w.shape[1] for w in ws)
    mx_dtype = ws[0].dtype

    block_b = _pick_block_b(B)
    b_pad = _round_up(B, block_b)
    n_steps = b_pad // block_b

    # Pad batch to a tile multiple and features only to round_up(d_in, 128).
    x_p = jnp.zeros((b_pad, d_in_pad), mx_dtype).at[:B, :d_in].set(x.astype(mx_dtype))

    # Explicit VMEM budget (weights single-buffered, x double-buffered, plus
    # activation temporaries) with generous margin.
    est = 2 * block_b * d_in_pad * x_p.dtype.itemsize
    est += sum(int(w.size) * w.dtype.itemsize for w in ws)
    est += int(vecs.size) * 4
    est += 2 * 2 * block_b * 4                       # output slab buffers
    est += 4 * block_b * max(n_pads) * 4             # activation temporaries
    vmem_limit = int(min(120 * 1024 * 1024, max(32 * 1024 * 1024, 2 * est)))

    in_specs = [pl.BlockSpec((block_b, d_in_pad), lambda i: (i, 0))]
    for w in ws:
        # Grid-invariant: single-buffer (index_map is constant).
        in_specs.append(pl.BlockSpec(w.shape, lambda i: (0, 0),
                                     pipeline_mode=pl.Buffered(1)))
    in_specs.append(pl.BlockSpec(vecs.shape, lambda i: (0, 0),
                                 pipeline_mode=pl.Buffered(1)))

    out = pl.pallas_call(
        _make_kernel(n_hidden, n_pads, mx_dtype),
        out_shape=jax.ShapeDtypeStruct((1, b_pad), jnp.float32),
        grid=(n_steps,),
        in_specs=in_specs,
        out_specs=pl.BlockSpec((1, block_b), lambda i: (0, i)),
        compiler_params=pltpu.CompilerParams(
            dimension_semantics=("parallel",),
            vmem_limit_bytes=vmem_limit),
    )(x_p, *ws, vecs)

    # Lane-dense slab -> (B, 1); add the BN-shift-through-w_out constant here.
    return out[0, :B][:, None] + folded["c_out"]


def mixed_input_mlp_cox_time_ref(params, input_numeric, input_categoric, time):
    """Pure-JAX reference (unfolded BN, f32) for correctness checking."""
    embs = [tbl[input_categoric[:, i]] for i, tbl in enumerate(params["embeddings"])]
    h = jnp.concatenate([input_numeric.astype(jnp.float32),
                         time.astype(jnp.float32)] + embs, axis=1)
    for (w, b, g, be, mu, var) in params["hidden"]:
        h = jnp.maximum(h @ w + b, 0.0)
        h = (h - mu) * jax.lax.rsqrt(var + 1e-5) * g + be
    return h @ params["w_out"]


def init_params(key, in_features, num_embeddings, embedding_dims, num_nodes):
    """Deterministic synthetic parameters matching the module's __init__ shapes."""
    params = {"embeddings": [], "hidden": []}
    keys = jax.random.split(key, len(num_embeddings) + 6 * len(num_nodes) + 1)
    ki = 0

    # Entity embeddings (one table per categorical column).
    for n_emb, d_emb in zip(num_embeddings, embedding_dims):
        params["embeddings"].append(
            0.1 * jax.random.normal(keys[ki], (n_emb, d_emb), jnp.float32))
        ki += 1

    # MLP: in_features (+1 for time) + sum(embedding_dims) -> num_nodes -> 1
    prev = in_features + 1 + sum(embedding_dims)
    for h in num_nodes:
        # kaiming_normal_ (relu): std = sqrt(2 / fan_in)
        w = jax.random.normal(keys[ki], (prev, h), jnp.float32) * jnp.sqrt(2.0 / prev)
        ki += 1
        bound = 1.0 / jnp.sqrt(prev)
        b = jax.random.uniform(keys[ki], (1, h), jnp.float32, -bound, bound)
        ki += 1
        # Non-trivial (eval-mode) BN parameters so the host-side folding is exercised.
        gamma = jax.random.uniform(keys[ki], (1, h), jnp.float32, 0.8, 1.2)
        ki += 1
        beta = 0.1 * jax.random.normal(keys[ki], (1, h), jnp.float32)
        ki += 1
        run_mean = 0.1 * jax.random.normal(keys[ki], (1, h), jnp.float32)
        ki += 1
        run_var = jax.random.uniform(keys[ki], (1, h), jnp.float32, 0.5, 1.5)
        ki += 1
        params["hidden"].append((w, b, gamma, beta, run_mean, run_var))
        prev = h

    # Output layer: out_features=1, bias=False (CoxTime removes output bias).
    w_out = jax.random.normal(keys[ki], (prev, 1), jnp.float32) * jnp.sqrt(2.0 / prev)
    params["w_out"] = w_out
    return params


if __name__ == "__main__":
    # Small, module-consistent shapes.
    B = 16                       # batch
    in_features = 4              # numeric covariates
    num_embeddings = [5, 7]      # two categorical columns
    embedding_dims = [3, 4]
    num_nodes = [32, 32]         # two hidden layers

    key = jax.random.PRNGKey(0)
    k_par, k_num, k_cat0, k_cat1, k_t = jax.random.split(key, 5)

    params = init_params(k_par, in_features, num_embeddings, embedding_dims, num_nodes)

    input_numeric = jax.random.normal(k_num, (B, in_features), jnp.float32)
    input_categoric = jnp.stack(
        [jax.random.randint(k_cat0, (B,), 0, num_embeddings[0]),
         jax.random.randint(k_cat1, (B,), 0, num_embeddings[1])], axis=1)
    time = jax.random.uniform(k_t, (B, 1), jnp.float32)

    ref = mixed_input_mlp_cox_time_ref(params, input_numeric, input_categoric, time)

    # 1) Exact-math check: f32 matmul path, tight tolerance (validates BN fold
    #    + padding + lane-dense output plumbing).
    folded_f32 = fold_params(params, matmul_dtype=jnp.float32)
    out_f32 = jax.block_until_ready(
        mixed_input_mlp_cox_time(folded_f32, input_numeric, input_categoric, time))
    assert out_f32.shape == (B, 1)
    assert jnp.allclose(out_f32, ref, atol=1e-4, rtol=1e-4), \
        float(jnp.max(jnp.abs(out_f32 - ref)))

    # 2) Production path: bf16 MXU operands with f32 accumulation (loosened
    #    tolerance per bf16 precision).
    folded = fold_params(params)                       # bf16 weights (default)
    out = jax.block_until_ready(
        mixed_input_mlp_cox_time(folded, input_numeric, input_categoric, time))
    assert out.shape == (B, 1)
    assert jnp.allclose(out, ref, atol=5e-2, rtol=5e-2), \
        float(jnp.max(jnp.abs(out - ref)))

    print("KERNEL_OK")
</pallas_src>

<mosaic_0001>
module attributes {stable_mosaic.version = 11 : i64} {
  func.func @kernel(%arg0: i32, %arg1: memref<16x128xf32, #tpu.memory_space<vmem>>, %arg2: memref<128x128xf32, #tpu.memory_space<vmem>>, %arg3: memref<128x128xf32, #tpu.memory_space<vmem>>, %arg4: memref<3x128xf32, #tpu.memory_space<vmem>>, %arg5: memref<1x16xf32, #tpu.memory_space<vmem>>) attributes {dimension_semantics = [#tpu.dimension_semantics<parallel>], iteration_bounds = array<i64: 1>, scalar_prefetch = 0 : i64, scratch_operands = 0 : i64, tpu.core_type = #tpu.core_type<tc>, window_params = [{transform_indices = @transform_0, window_bounds = array<i64: 16, 128>}, {pipeline_mode = #tpu.pipeline_mode<synchronous>, transform_indices = @transform_1, window_bounds = array<i64: 128, 128>}, {pipeline_mode = #tpu.pipeline_mode<synchronous>, transform_indices = @transform_2, window_bounds = array<i64: 128, 128>}, {pipeline_mode = #tpu.pipeline_mode<synchronous>, transform_indices = @transform_3, window_bounds = array<i64: 3, 128>}, {transform_indices = @transform_4, window_bounds = array<i64: 1, 16>}]} {
    %c0 = arith.constant 0 : index
    %c0_0 = arith.constant 0 : index
    %0 = vector.load %arg1[%c0, %c0_0] : memref<16x128xf32, #tpu.memory_space<vmem>>, vector<16x128xf32>
    %c0_1 = arith.constant 0 : index
    %c0_2 = arith.constant 0 : index
    %1 = vector.load %arg2[%c0_1, %c0_2] : memref<128x128xf32, #tpu.memory_space<vmem>>, vector<128x128xf32>
    %cst = arith.constant dense<0.000000e+00> : vector<16x128xf32>
    %2 = tpu.matmul %0, %1, %cst {dimension_numbers = #tpu.dot_dimension_numbers<[1], [0], [0], [1], [0, 0, 1, 1], [], []>} : vector<16x128xf32>, vector<128x128xf32>, vector<16x128xf32> -> vector<16x128xf32>
    %c0_3 = arith.constant 0 : index
    %c0_4 = arith.constant 0 : index
    %3 = vector.load %arg4[%c0_3, %c0_4] : memref<3x128xf32, #tpu.memory_space<vmem>>, vector<1x128xf32>
    %4 = vector.broadcast %3 : vector<1x128xf32> to vector<16x128xf32>
    %5 = arith.addf %2, %4 : vector<16x128xf32>
    %cst_5 = arith.constant 0.000000e+00 : f32
    %6 = vector.broadcast %cst_5 : f32 to vector<16x128xf32>
    %7 = arith.maximumf %5, %6 : vector<16x128xf32>
    %c0_6 = arith.constant 0 : index
    %c0_7 = arith.constant 0 : index
    %8 = vector.load %arg3[%c0_6, %c0_7] : memref<128x128xf32, #tpu.memory_space<vmem>>, vector<128x128xf32>
    %cst_8 = arith.constant dense<0.000000e+00> : vector<16x128xf32>
    %9 = tpu.matmul %7, %8, %cst_8 {dimension_numbers = #tpu.dot_dimension_numbers<[1], [0], [0], [1], [0, 0, 1, 1], [], []>} : vector<16x128xf32>, vector<128x128xf32>, vector<16x128xf32> -> vector<16x128xf32>
    %c1 = arith.constant 1 : index
    %c0_9 = arith.constant 0 : index
    %10 = vector.load %arg4[%c1, %c0_9] : memref<3x128xf32, #tpu.memory_space<vmem>>, vector<1x128xf32>
    %11 = vector.broadcast %10 : vector<1x128xf32> to vector<16x128xf32>
    %12 = arith.addf %9, %11 : vector<16x128xf32>
    %cst_10 = arith.constant 0.000000e+00 : f32
    %13 = vector.broadcast %cst_10 : f32 to vector<16x128xf32>
    %14 = arith.maximumf %12, %13 : vector<16x128xf32>
    %c2 = arith.constant 2 : index
    %c0_11 = arith.constant 0 : index
    %15 = vector.load %arg4[%c2, %c0_11] : memref<3x128xf32, #tpu.memory_space<vmem>>, vector<1x128xf32>
    %16 = vector.broadcast %15 : vector<1x128xf32> to vector<16x128xf32>
    %17 = arith.mulf %14, %16 : vector<16x128xf32>
    %cst_12 = arith.constant dense<0.000000e+00> : vector<16xf32>
    %18 = vector.multi_reduction <add>, %17, %cst_12 [1] : vector<16x128xf32> to vector<16xf32>
    %19 = vector.shape_cast %18 : vector<16xf32> to vector<1x16xf32>
    %c0_13 = arith.constant 0 : index
    %c0_14 = arith.constant 0 : index
    %20 = vector.load %arg5[%c0_13, %c0_14] : memref<1x16xf32, #tpu.memory_space<vmem>>, vector<1x16xf32>
    tpu.vector_store %arg5[%c0_13, %c0_14], %19 {strides = array<i32>} : memref<1x16xf32, #tpu.memory_space<vmem>>, vector<1x16xf32>,
    return
  }
  func.func @transform_0(%arg0: i32) -> (i32, i32) {
    %c0_i32 = arith.constant 0 : i32
    %c0_i32_0 = arith.constant 0 : i32
    return %arg0, %c0_i32 : i32, i32
  }
  func.func @transform_1(%arg0: i32) -> (i32, i32) {
    %c0_i32 = arith.constant 0 : i32
    %c0_i32_0 = arith.constant 0 : i32
    %c0_i32_1 = arith.constant 0 : i32
    return %c0_i32, %c0_i32_0 : i32, i32
  }
  func.func @transform_2(%arg0: i32) -> (i32, i32) {
    %c0_i32 = arith.constant 0 : i32
    %c0_i32_0 = arith.constant 0 : i32
    %c0_i32_1 = arith.constant 0 : i32
    return %c0_i32, %c0_i32_0 : i32, i32
  }
  func.func @transform_3(%arg0: i32) -> (i32, i32) {
    %c0_i32 = arith.constant 0 : i32
    %c0_i32_0 = arith.constant 0 : i32
    %c0_i32_1 = arith.constant 0 : i32
    return %c0_i32, %c0_i32_0 : i32, i32
  }
  func.func @transform_4(%arg0: i32) -> (i32, i32) {
    %c0_i32 = arith.constant 0 : i32
    %c0_i32_0 = arith.constant 0 : i32
    return %c0_i32, %arg0 : i32, i32
  }
}

</mosaic_0001>

<llo_original>
// kernel: mixed_input_mlp_cox_time.1
$region0: #{mixed_input_mlp_cox_time.1}
  #allocation0 [shape = 'u32[]', space=smem, size = 0x4, offset = 0x4, fixed_abs, tag = 'smem constant byte address 0x4 - core index']
  #allocation1 [shape = 'u32[72,128]{1,0:T(1,128)}', space=vmem, size = 0x9000, scoped, tag = 'internal scratch']
  %s0 = inlined_call_operand.vmem [shape: f32[16,128], index: 0, kind: input, shape index: {}]
  %s1 = inlined_call_operand.vmem [shape: f32[128,128], index: 1, kind: input, shape index: {}]
  %s2 = inlined_call_operand.vmem [shape: f32[128,128], index: 2, kind: input, shape index: {}]
  %s3 = inlined_call_operand.vmem [shape: f32[3,128], index: 3, kind: input, shape index: {}]
  %s4 = inlined_call_operand.vmem [shape: f32[1,16], index: 4, kind: output, shape index: {}]
  %s5 = sld [smem:[#allocation0]]
  $region26: #{mixed_input_mlp_cox_time.1} parent=0
    _
  %s7 = ssub.s32 1, %s5
  %s8 = scalar_select 0, %s7, %s5
  // Predicated region
  $region2: #{mixed_input_mlp_cox_time.1} parent=0 // pred_check
    _
  $region3: #{mixed_input_mlp_cox_time.1} parent=0 // pred_check_branch
    %10 = sbr.rel (0) target = $region5
  $region4: #{mixed_input_mlp_cox_time.1} parent=0 // pred_region
    _
  $region5: #{mixed_input_mlp_cox_time.1} parent=0 // pred_fallthru
    _
  // Predicated region
  $region6: #{mixed_input_mlp_cox_time.1} parent=0 // pred_check
    _
  $region7: #{mixed_input_mlp_cox_time.1} parent=0 // pred_check_branch
    %12 = sbr.rel (0) target = $region9
  $region8: #{mixed_input_mlp_cox_time.1} parent=0 // pred_region
    _
  $region9: #{mixed_input_mlp_cox_time.1} parent=0 // pred_fallthru
    _
  // Predicated region
  $region10: #{mixed_input_mlp_cox_time.1} parent=0 // pred_check
    _
  $region11: #{mixed_input_mlp_cox_time.1} parent=0 // pred_check_branch
    %14 = sbr.rel (0) target = $region13
  $region12: #{mixed_input_mlp_cox_time.1} parent=0 // pred_region
    _
  $region13: #{mixed_input_mlp_cox_time.1} parent=0 // pred_fallthru
    _
  // Predicated region
  $region14: #{mixed_input_mlp_cox_time.1} parent=0 // pred_check
    _
  $region15: #{mixed_input_mlp_cox_time.1} parent=0 // pred_check_branch
    %16 = sbr.rel (0) target = $region17
  $region16: #{mixed_input_mlp_cox_time.1} parent=0 // pred_region
    _
  $region17: #{mixed_input_mlp_cox_time.1} parent=0 // pred_fallthru
    _
  %v17 = vld [vmem:[%s0] sm:$0xff]
  %v18 = vld [vmem:[%s0 + $0x8] sm:$0xff]
  %v19 = vld [vmem:[%s1] sm:$0xff]
  %v20 = vld [vmem:[%s1 + $0x8] sm:$0xff]
  %v21 = vld [vmem:[%s1 + $0x10] sm:$0xff]
  %v22 = vld [vmem:[%s1 + $0x18] sm:$0xff]
  %v23 = vld [vmem:[%s1 + $0x20] sm:$0xff]
  %v24 = vld [vmem:[%s1 + $0x28] sm:$0xff]
  %v25 = vld [vmem:[%s1 + $0x30] sm:$0xff]
  %v26 = vld [vmem:[%s1 + $0x38] sm:$0xff]
  %v27 = vld [vmem:[%s1 + $0x40] sm:$0xff]
  %v28 = vld [vmem:[%s1 + $0x48] sm:$0xff]
  %v29 = vld [vmem:[%s1 + $0x50] sm:$0xff]
  %v30 = vld [vmem:[%s1 + $0x58] sm:$0xff]
  %v31 = vld [vmem:[%s1 + $0x60] sm:$0xff]
  %v32 = vld [vmem:[%s1 + $0x68] sm:$0xff]
  %v33 = vld [vmem:[%s1 + $0x70] sm:$0xff]
  %v34 = vld [vmem:[%s1 + $0x78] sm:$0xff]
  %v35 = vld [vmem:[%s3] sm:$0x1]
  %v36 = vperm.slane %v35, 0
  %37 = vmatpush.msra.mxu0 %v34
  %38 = vmatpush.msra.mxu0 %v33
  %39 = vmatpush.msra.mxu0 %v32
  %40 = vmatpush.msra.mxu0 %v31
  %41 = vmatpush.msra.mxu0 %v30
  %42 = vmatpush.msra.mxu0 %v29
  %43 = vmatpush.msra.mxu0 %v28
  %44 = vmatpush.msra.mxu0 %v27
  %45 = vmatpush.msra.mxu0 %v26
  %46 = vmatpush.msra.mxu0 %v25
  %47 = vmatpush.msra.mxu0 %v24
  %48 = vmatpush.msra.mxu0 %v23
  %49 = vmatpush.msra.mxu0 %v22
  %50 = vmatpush.msra.mxu0 %v21
  %51 = vmatpush.msra.mxu0 %v20
  %52 = vmatpush.msra.mxu0 %v19
  %53 = vmatmul.f32.gmra.mxu0 %v17
  %v54 = vpop.f32.mrf.mxu0
  %v55 = vadd.f32 %v36, %v54
  %56 = vmatmul.f32.gmra.mxu0 %v18
  %v57 = vpop.f32.mrf.mxu0
  %v58 = vadd.f32 %v36, %v57
  %59 = vdwg.mxu0
  %v60 = vmax.f32 %v55, 0.0
  %v61 = vmax.f32 %v58, 0.0
  %v62 = vld [vmem:[%s2] sm:$0xff]
  %v63 = vld [vmem:[%s2 + $0x8] sm:$0xff]
  %v64 = vld [vmem:[%s2 + $0x10] sm:$0xff]
  %v65 = vld [vmem:[%s2 + $0x18] sm:$0xff]
  %v66 = vld [vmem:[%s2 + $0x20] sm:$0xff]
  %v67 = vld [vmem:[%s2 + $0x28] sm:$0xff]
  %v68 = vld [vmem:[%s2 + $0x30] sm:$0xff]
  %v69 = vld [vmem:[%s2 + $0x38] sm:$0xff]
  %v70 = vld [vmem:[%s2 + $0x40] sm:$0xff]
  %v71 = vld [vmem:[%s2 + $0x48] sm:$0xff]
  %v72 = vld [vmem:[%s2 + $0x50] sm:$0xff]
  %v73 = vld [vmem:[%s2 + $0x58] sm:$0xff]
  %v74 = vld [vmem:[%s2 + $0x60] sm:$0xff]
  %v75 = vld [vmem:[%s2 + $0x68] sm:$0xff]
  %v76 = vld [vmem:[%s2 + $0x70] sm:$0xff]
  %v77 = vld [vmem:[%s2 + $0x78] sm:$0xff]
  %v78 = vld [vmem:[%s3 + $0x1] sm:$0x1]
  %v79 = vperm.slane %v78, 0
  %80 = vmatpush.msra.mxu0 %v77
  %81 = vmatpush.msra.mxu0 %v76
  %82 = vmatpush.msra.mxu0 %v75
  %83 = vmatpush.msra.mxu0 %v74
  %84 = vmatpush.msra.mxu0 %v73
  %85 = vmatpush.msra.mxu0 %v72
  %86 = vmatpush.msra.mxu0 %v71
  %87 = vmatpush.msra.mxu0 %v70
  %88 = vmatpush.msra.mxu0 %v69
  %89 = vmatpush.msra.mxu0 %v68
  %90 = vmatpush.msra.mxu0 %v67
  %91 = vmatpush.msra.mxu0 %v66
  %92 = vmatpush.msra.mxu0 %v65
  %93 = vmatpush.msra.mxu0 %v64
  %94 = vmatpush.msra.mxu0 %v63
  %95 = vmatpush.msra.mxu0 %v62
  %96 = vmatmul.f32.gmra.mxu0 %v60
  %v97 = vpop.f32.mrf.mxu0
  %v98 = vadd.f32 %v79, %v97
  %99 = vmatmul.f32.gmra.mxu0 %v61
  %v100 = vpop.f32.mrf.mxu0
  %v101 = vadd.f32 %v79, %v100
  %102 = vdwg.mxu0
  %v103 = vmax.f32 %v98, 0.0
  %v104 = vmax.f32 %v101, 0.0
  %v105 = vld [vmem:[%s3 + $0x2] sm:$0x1]
  %v106 = vperm.slane %v105, 0
  %v107 = vmul.f32 %v103, %v106
  %v108 = vmul.f32 %v104, %v106
  %109 = vadd.xlane.f32.xlu0 %v107
  %v110 = vpop.xlane.xlu0 %109
  %111 = vadd.xlane.f32.xlu0 %v108
  %v112 = vpop.xlane.xlu0 %111
  %v115 = vlaneseq
  %v116 = vand.u32 %v115, 127
  %v117 = vperm.slane %v110, %v116
  %v118 = vadd.s32 %v116, 4294967288
  %v119 = vperm.slane %v112, %v118
  %vm120 = vcmask 130112
  %v121 = vsel %vm120, %v119, %v117
  %vm123 = vcmask 122880
  %124 = vst.msk [vmem:[%s4] sm:$0x1] %vm123, %v121
  // Predicated region
  $region18: #{mixed_input_mlp_cox_time.1} parent=0 // pred_check
    _
  $region19: #{mixed_input_mlp_cox_time.1} parent=0 // pred_check_branch
    %126 = sbr.rel (0) target = $region21
  $region20: #{mixed_input_mlp_cox_time.1} parent=0 // pred_region
    _
  $region21: #{mixed_input_mlp_cox_time.1} parent=0 // pred_fallthru
    _
  // Predicated region
  $region22: #{mixed_input_mlp_cox_time.1} parent=0 // pred_check
    _
  $region23: #{mixed_input_mlp_cox_time.1} parent=0 // pred_check_branch
    %128 = sbr.rel (0) target = $region25
  $region24: #{mixed_input_mlp_cox_time.1} parent=0 // pred_region
    _
  $region25: #{mixed_input_mlp_cox_time.1} parent=0 // pred_fallthru
    _

</llo_original>
